<compile_context>
chip_gen: v7x
topology: tpu7x:2x2x1
jax: 0.10.0
libtpu: 0.0.40
codegen_flags: <defaults>
</compile_context>

<pallas_src>
import functools

import jax
import jax.numpy as jnp
from jax import lax
from jax.experimental import pallas as pl
from jax.experimental.pallas import tpu as pltpu

_LN2 = 0.6931471805599453


def _cdiv(a, b):
    return -(-a // b)


def _round_up(x, m):
    return ((x + m - 1) // m) * m


def _nll_tile(loc, scale, target, eps):
    """Elementwise Laplace NLL for one tile, computed in f32."""
    loc = loc.astype(jnp.float32)
    target = target.astype(jnp.float32)
    # torch's no_grad clamp_ only changes the backward; forward == maximum.
    scale = jnp.maximum(scale.astype(jnp.float32), jnp.float32(eps))
    # EUP reciprocal + one Newton step (~f32 accuracy) instead of a VALU divide.
    inv = pl.reciprocal(scale, approx=True)
    inv = inv * (2.0 - scale * inv)
    return (jnp.log(scale) + jnp.float32(_LN2)) + jnp.abs(target - loc) * inv


def _split_refs(refs, d, split):
    """Return (loc_tile, scale_tile, target_ref, out_ref) for either layout."""
    if split:                                  # two lane-aligned views of pred
        loc_ref, scale_ref, tgt_ref, out_ref = refs
        return loc_ref[...], scale_ref[...], tgt_ref, out_ref
    pred_ref, tgt_ref, out_ref = refs          # one packed (tile_n, 2d) block
    return pred_ref[:, :d], pred_ref[:, d:], tgt_ref, out_ref


def _reduce_kernel(*refs, d, eps, n_rows, tile_n, tiles_per_core, split):
    loc, scale, tgt_ref, out_ref = _split_refs(refs, d, split)
    c = pl.program_id(0)       # core split (parallel)
    i = pl.program_id(1)       # row tiles for this core (arbitrary)

    @pl.when(i == 0)
    def _init():
        out_ref[...] = jnp.zeros_like(out_ref)

    nll = _nll_tile(loc, scale, tgt_ref[...], eps)

    # Mask the tail tile (partial rows or a fully clamped/duplicated tile)
    # BEFORE accumulating.
    start = (c * tiles_per_core + i) * tile_n
    rows_left = n_rows - start
    row_id = lax.broadcasted_iota(jnp.int32, nll.shape, 0)
    nll = jnp.where(row_id < rows_left, nll, jnp.float32(0.0))

    # (8, d) accumulator: the reshape matches the (8, 128) VMEM tiling, so the
    # per-step accumulation is pure whole-vreg VPU adds (no XLU reduce).
    out_ref[...] += nll.reshape(tile_n // 8, 8, nll.shape[-1]).sum(axis=0)


def _elementwise_kernel(*refs, d, eps, split):
    loc, scale, tgt_ref, out_ref = _split_refs(refs, d, split)
    out_ref[...] = _nll_tile(loc, scale, tgt_ref[...], eps).astype(out_ref.dtype)


def laplace_nll_loss(pred, target, *, eps=1e-6, reduction="mean"):
    """Pallas TPU implementation of LaplaceNLLLoss.forward."""
    if pred.shape[-1] % 2 != 0:
        raise ValueError("pred last dim must be even (loc/scale chunks)")
    d = pred.shape[-1] // 2
    if target.shape != pred.shape[:-1] + (d,):
        raise ValueError(
            f"target shape {target.shape} incompatible with pred {pred.shape}")

    out_dtype = jnp.result_type(pred.dtype, target.dtype)
    n_elem = target.size

    # Free reshapes of contiguous arrays: no loc/scale copies in the wrapper.
    pred2 = pred.reshape(-1, 2 * d)
    tgt2 = target.reshape(-1, d)
    n_rows = pred2.shape[0]

    split = (d % 128 == 0)   # lane-aligned loc/scale views of pred2 possible

    # --- row tile: dtype sublane multiple, ~2 MiB of pred per block, capped so
    # --- double-buffered VMEM stays <= ~8 MiB (default scoped limit everywhere).
    itemsize = jnp.dtype(pred.dtype).itemsize
    sub = max(8, 32 // itemsize)                 # 8 f32 / 16 bf16 / 32 int8
    pred_w_vmem = _round_up(2 * d, 128)
    tgt_w_vmem = _round_up(d, 128)
    out_w_vmem = tgt_w_vmem if reduction == "none" else 0
    bytes_per_row_vmem = 4 * (pred_w_vmem + tgt_w_vmem + out_w_vmem)  # f32 bound
    vmem_cap = max(sub,
                   ((8 * 1024 * 1024) // (2 * bytes_per_row_vmem)) // sub * sub)
    hbm_knee = max(sub,
                   _round_up((2 * 1024 * 1024) // max(1, 2 * d * itemsize), sub))
    tile_n = max(sub, min(hbm_knee, vmem_cap, _round_up(n_rows, sub)))

    num_tiles = _cdiv(n_rows, tile_n)

    if reduction in ("mean", "sum"):
        n_cores = 2                                  # v7x has 2 TCs; harmless elsewhere
        tiles_per_core = _cdiv(num_tiles, n_cores)
        # Clamp so a core's surplus tile re-reads the last valid block
        # (fully masked in-kernel) instead of issuing an OOB DMA.
        row_blk = lambda c, i: jnp.minimum(c * tiles_per_core + i, num_tiles - 1)

        if split:
            in_arrays = (pred2, pred2, tgt2)
            in_specs = [
                pl.BlockSpec((tile_n, d), lambda c, i: (row_blk(c, i), 0)),   # loc
                pl.BlockSpec((tile_n, d), lambda c, i: (row_blk(c, i), 1)),   # scale
                pl.BlockSpec((tile_n, d), lambda c, i: (row_blk(c, i), 0)),   # target
            ]
        else:
            in_arrays = (pred2, tgt2)
            in_specs = [
                pl.BlockSpec((tile_n, 2 * d), lambda c, i: (row_blk(c, i), 0)),
                pl.BlockSpec((tile_n, d), lambda c, i: (row_blk(c, i), 0)),
            ]

        kernel = functools.partial(
            _reduce_kernel, d=d, eps=eps, n_rows=n_rows, tile_n=tile_n,
            tiles_per_core=tiles_per_core, split=split)

        partials = pl.pallas_call(
            kernel,
            out_shape=jax.ShapeDtypeStruct((n_cores * 8, d), jnp.float32),
            grid=(n_cores, tiles_per_core),
            in_specs=in_specs,
            out_specs=pl.BlockSpec((8, d), lambda c, i: (c, 0)),
            compiler_params=pltpu.CompilerParams(
                dimension_semantics=("parallel", "arbitrary")),
        )(*in_arrays)

        total = partials.sum()                      # tiny (16, d) reduce in XLA
        if reduction == "mean":
            total = total / jnp.float32(n_elem)
        return total.astype(out_dtype)

    elif reduction == "none":
        if split:
            in_arrays = (pred2, pred2, tgt2)
            in_specs = [
                pl.BlockSpec((tile_n, d), lambda i: (i, 0)),   # loc
                pl.BlockSpec((tile_n, d), lambda i: (i, 1)),   # scale
                pl.BlockSpec((tile_n, d), lambda i: (i, 0)),   # target
            ]
        else:
            in_arrays = (pred2, tgt2)
            in_specs = [
                pl.BlockSpec((tile_n, 2 * d), lambda i: (i, 0)),
                pl.BlockSpec((tile_n, d), lambda i: (i, 0)),
            ]
        kernel = functools.partial(_elementwise_kernel, d=d, eps=eps, split=split)
        nll = pl.pallas_call(
            kernel,
            out_shape=jax.ShapeDtypeStruct((n_rows, d), out_dtype),
            grid=(num_tiles,),
            in_specs=in_specs,
            out_specs=pl.BlockSpec((tile_n, d), lambda i: (i, 0)),
            compiler_params=pltpu.CompilerParams(
                dimension_semantics=("parallel",)),
        )(*in_arrays)
        # TODO(synk): lane-densify the d % 128 != 0 'none' output (masked vst
        # on narrow last dims) if it ever shows up on a hot path.
        return nll.reshape(target.shape)
    else:
        raise ValueError(f"{reduction} is not a valid value for reduction")


def _reference(pred, target, eps=1e-6, reduction="mean"):
    d = pred.shape[-1] // 2
    loc, scale = pred[..., :d], pred[..., d:]
    scale = jnp.maximum(scale, eps)
    nll = jnp.log(2.0 * scale) + jnp.abs(target - loc) / scale
    if reduction == "mean":
        return nll.mean()
    if reduction == "sum":
        return nll.sum()
    return nll


if __name__ == "__main__":
    key = jax.random.PRNGKey(0)
    k1, k2, k3, k4, k5, k6 = jax.random.split(key, 6)

    # --- Test 1: lane-aligned d=128 (split loc/scale views of pred) ---
    B, S, D = 4, 64, 128
    loc = jax.random.normal(k1, (B, S, D), jnp.float32)
    scale_raw = jax.random.uniform(k2, (B, S, D), jnp.float32,
                                   minval=0.05, maxval=2.0)
    scale_raw = scale_raw.at[0, 0, 0].set(-1.0)          # exercise the eps clamp
    pred = jnp.concatenate([loc, scale_raw], axis=-1)    # (B, S, 2D)
    target = jax.random.normal(k3, (B, S, D), jnp.float32)

    out_mean = jax.block_until_ready(laplace_nll_loss(pred, target))
    ref_mean = _reference(pred, target)
    assert out_mean.shape == ()
    assert jnp.allclose(out_mean, ref_mean, rtol=1e-4), (out_mean, ref_mean)

    out_sum = jax.block_until_ready(laplace_nll_loss(pred, target, reduction="sum"))
    ref_sum = _reference(pred, target, reduction="sum")
    assert jnp.allclose(out_sum, ref_sum, rtol=1e-4), (out_sum, ref_sum)

    out_none = jax.block_until_ready(laplace_nll_loss(pred, target, reduction="none"))
    ref_none = _reference(pred, target, reduction="none")
    assert out_none.shape == (B, S, D)
    assert jnp.allclose(out_none, ref_none, rtol=1e-4, atol=1e-5)

    # --- Test 2: small / odd shape, d=2 (packed block, partial row tile) ---
    B2, A2, T2, D2 = 2, 3, 10, 2
    loc2 = jax.random.normal(k4, (B2, A2, T2, D2), jnp.float32)
    scale2 = jax.random.uniform(k5, (B2, A2, T2, D2), jnp.float32,
                                minval=0.1, maxval=2.0)
    pred2 = jnp.concatenate([loc2, scale2], axis=-1)     # (2, 3, 10, 4)
    target2 = jax.random.normal(k6, (B2, A2, T2, D2), jnp.float32)

    out2 = jax.block_until_ready(laplace_nll_loss(pred2, target2))
    ref2 = _reference(pred2, target2)
    assert jnp.allclose(out2, ref2, rtol=1e-4, atol=1e-6), (out2, ref2)

    out2_sum = jax.block_until_ready(laplace_nll_loss(pred2, target2, reduction="sum"))
    ref2_sum = _reference(pred2, target2, reduction="sum")
    assert jnp.allclose(out2_sum, ref2_sum, rtol=1e-4, atol=1e-5), (out2_sum, ref2_sum)

    out2_none = jax.block_until_ready(
        laplace_nll_loss(pred2, target2, reduction="none"))
    ref2_none = _reference(pred2, target2, reduction="none")
    assert out2_none.shape == (B2, A2, T2, D2)
    assert jnp.allclose(out2_none, ref2_none, rtol=1e-4, atol=1e-5)

    print("KERNEL_OK")
</pallas_src>

<mosaic_0001>
module attributes {stable_mosaic.version = 11 : i64} {
  func.func @_reduce_kernel(%arg0: i32, %arg1: i32, %arg2: memref<256x128xf32, #tpu.memory_space<vmem>>, %arg3: memref<256x128xf32, #tpu.memory_space<vmem>>, %arg4: memref<256x128xf32, #tpu.memory_space<vmem>>, %arg5: memref<8x128xf32, #tpu.memory_space<vmem>>) attributes {dimension_semantics = [#tpu.dimension_semantics<parallel>, #tpu.dimension_semantics<arbitrary>], iteration_bounds = array<i64: 2, 1>, scalar_prefetch = 0 : i64, scratch_operands = 0 : i64, tpu.core_type = #tpu.core_type<tc>, window_params = [{transform_indices = @transform_0, window_bounds = array<i64: 256, 128>}, {transform_indices = @transform_1, window_bounds = array<i64: 256, 128>}, {transform_indices = @transform_2, window_bounds = array<i64: 256, 128>}, {transform_indices = @transform_3, window_bounds = array<i64: 8, 128>}]} {
    %c0 = arith.constant 0 : index
    %c0_0 = arith.constant 0 : index
    %0 = vector.load %arg2[%c0, %c0_0] : memref<256x128xf32, #tpu.memory_space<vmem>>, vector<256x128xf32>
    %c0_1 = arith.constant 0 : index
    %c0_2 = arith.constant 0 : index
    %1 = vector.load %arg3[%c0_1, %c0_2] : memref<256x128xf32, #tpu.memory_space<vmem>>, vector<256x128xf32>
    %c0_i32 = arith.constant 0 : i32
    %2 = arith.cmpi eq, %arg1, %c0_i32 : i32
    %3 = arith.extui %2 : i1 to i32
    %c0_i32_3 = arith.constant 0 : i32
    %4 = arith.cmpi ne, %3, %c0_i32_3 : i32
    scf.if %4 {
      %cst_15 = arith.constant 0.000000e+00 : f32
      %34 = vector.broadcast %cst_15 : f32 to vector<8x128xf32>
      %c0_16 = arith.constant 0 : index
      %c0_17 = arith.constant 0 : index
      %35 = vector.load %arg5[%c0_16, %c0_17] : memref<8x128xf32, #tpu.memory_space<vmem>>, vector<8x128xf32>
      tpu.vector_store %arg5[%c0_16, %c0_17], %34 {strides = array<i32>} : memref<8x128xf32, #tpu.memory_space<vmem>>, vector<8x128xf32>,
    } else {
    }
    %c0_4 = arith.constant 0 : index
    %c0_5 = arith.constant 0 : index
    %5 = vector.load %arg4[%c0_4, %c0_5] : memref<256x128xf32, #tpu.memory_space<vmem>>, vector<256x128xf32>
    %cst = arith.constant 9.99999997E-7 : f32
    %6 = vector.broadcast %cst : f32 to vector<256x128xf32>
    %7 = arith.maximumf %1, %6 : vector<256x128xf32>
    %8 = tpu.reciprocal %7 {approx = true} : vector<256x128xf32> -> vector<256x128xf32>
    %9 = arith.mulf %7, %8 : vector<256x128xf32>
    %cst_6 = arith.constant 2.000000e+00 : f32
    %10 = vector.broadcast %cst_6 : f32 to vector<256x128xf32>
    %11 = arith.subf %10, %9 : vector<256x128xf32>
    %12 = arith.mulf %8, %11 : vector<256x128xf32>
    %13 = math.log %7 : vector<256x128xf32>
    %cst_7 = arith.constant 0.693147182 : f32
    %14 = vector.broadcast %cst_7 : f32 to vector<256x128xf32>
    %15 = arith.addf %13, %14 : vector<256x128xf32>
    %16 = arith.subf %5, %0 : vector<256x128xf32>
    %17 = math.absf %16 : vector<256x128xf32>
    %18 = arith.mulf %17, %12 : vector<256x128xf32>
    %19 = arith.addf %15, %18 : vector<256x128xf32>
    %c1_i32 = arith.constant 1 : i32
    %20 = arith.muli %arg0, %c1_i32 : i32
    %21 = arith.addi %20, %arg1 : i32
    %c256_i32 = arith.constant 256 : i32
    %22 = arith.muli %21, %c256_i32 : i32
    %c256_i32_8 = arith.constant 256 : i32
    %23 = arith.subi %c256_i32_8, %22 : i32
    %24 = tpu.iota {dimensions = array<i32: 0>} : vector<256x128xi32>
    %25 = vector.broadcast %23 : i32 to vector<256x128xi32>
    %26 = arith.cmpi slt, %24, %25 : vector<256x128xi32>
    %cst_9 = arith.constant 0.000000e+00 : f32
    %27 = vector.broadcast %cst_9 : f32 to vector<256x128xf32>
    %28 = arith.select %26, %19, %27 : vector<256x128xi1>, vector<256x128xf32>
    %c0_10 = arith.constant 0 : index
    %c0_11 = arith.constant 0 : index
    %29 = vector.load %arg5[%c0_10, %c0_11] : memref<8x128xf32, #tpu.memory_space<vmem>>, vector<8x128xf32>
    %30 = vector.shape_cast %28 : vector<256x128xf32> to vector<32x8x128xf32>
    %cst_12 = arith.constant dense<0.000000e+00> : vector<8x128xf32>
    %31 = vector.multi_reduction <add>, %30, %cst_12 [0] : vector<32x8x128xf32> to vector<8x128xf32>
    %32 = arith.addf %29, %31 : vector<8x128xf32>
    %c0_13 = arith.constant 0 : index
    %c0_14 = arith.constant 0 : index
    %33 = vector.load %arg5[%c0_13, %c0_14] : memref<8x128xf32, #tpu.memory_space<vmem>>, vector<8x128xf32>
    tpu.vector_store %arg5[%c0_13, %c0_14], %32 {strides = array<i32>} : memref<8x128xf32, #tpu.memory_space<vmem>>, vector<8x128xf32>,
    return
  }
  func.func @transform_0(%arg0: i32, %arg1: i32) -> (i32, i32) {
    %c1_i32 = arith.constant 1 : i32
    %0 = arith.muli %arg0, %c1_i32 : i32
    %1 = arith.addi %0, %arg1 : i32
    %c0_i32 = arith.constant 0 : i32
    %2 = arith.minsi %1, %c0_i32 : i32
    %c0_i32_0 = arith.constant 0 : i32
    %c0_i32_1 = arith.constant 0 : i32
    return %2, %c0_i32_0 : i32, i32
  }
  func.func @transform_1(%arg0: i32, %arg1: i32) -> (i32, i32) {
    %c1_i32 = arith.constant 1 : i32
    %0 = arith.muli %arg0, %c1_i32 : i32
    %1 = arith.addi %0, %arg1 : i32
    %c0_i32 = arith.constant 0 : i32
    %2 = arith.minsi %1, %c0_i32 : i32
    %c1_i32_0 = arith.constant 1 : i32
    %c0_i32_1 = arith.constant 0 : i32
    return %2, %c1_i32_0 : i32, i32
  }
  func.func @transform_2(%arg0: i32, %arg1: i32) -> (i32, i32) {
    %c1_i32 = arith.constant 1 : i32
    %0 = arith.muli %arg0, %c1_i32 : i32
    %1 = arith.addi %0, %arg1 : i32
    %c0_i32 = arith.constant 0 : i32
    %2 = arith.minsi %1, %c0_i32 : i32
    %c0_i32_0 = arith.constant 0 : i32
    %c0_i32_1 = arith.constant 0 : i32
    return %2, %c0_i32_0 : i32, i32
  }
  func.func @transform_3(%arg0: i32, %arg1: i32) -> (i32, i32) {
    %c0_i32 = arith.constant 0 : i32
    %c0_i32_0 = arith.constant 0 : i32
    return %arg0, %c0_i32 : i32, i32
  }
}

</mosaic_0001>

<llo_original>
// kernel: tpu_custom_call.1
$region0: #{tpu_custom_call.1}
  #allocation0 [shape = 'u32[]', space=smem, size = 0x4, offset = 0x4, fixed_abs, tag = 'smem constant byte address 0x4 - core index']
  #allocation1 [shape = 'u32[144,128]{1,0:T(1,128)}', space=vmem, size = 0x12000, scoped, tag = 'internal scratch']
  %s0 = inlined_call_operand.hbm [shape: f32[256,256], index: 0, kind: input, shape index: {}]
  %s1 = inlined_call_operand.hbm [shape: f32[256,256], index: 1, kind: input, shape index: {}]
  %s2 = inlined_call_operand.hbm [shape: f32[256,128], index: 2, kind: input, shape index: {}]
  %s3 = inlined_call_operand.hbm [shape: f32[16,128], index: 3, kind: output, shape index: {}]
  %s4 = sld [smem:[#allocation0]]
  $region61: #{tpu_custom_call.1} parent=0
    _
  %s6 = ssub.s32 1, %s4
  %s7 = scalar_select 0, %s6, %s4
  $region1: #{tpu_custom_call.1} parent=0
    #allocation2 [shape = 'u8[262144]{0}', space=vmem, size = 0x40000, scoped, tag = 'input window, operand 0']
    #allocation3 [shape = 's32[2]{0}', space=sflag, size = 0x8, scoped, tag = 'scoped memory for tpu_custom_call.1']
    #allocation4 [shape = 's32[2]{0}', space=sflag, size = 0x8, scoped, tag = 'scoped memory for tpu_custom_call.1']
    #allocation5 [shape = 'u8[262144]{0}', space=vmem, size = 0x40000, scoped, tag = 'input window, operand 1']
    #allocation6 [shape = 's32[2]{0}', space=sflag, size = 0x8, scoped, tag = 'scoped memory for tpu_custom_call.1']
    #allocation7 [shape = 'u8[262144]{0}', space=vmem, size = 0x40000, scoped, tag = 'input window, operand 2']
    #allocation8 [shape = 'u8[8192]{0}', space=vmem, size = 0x2000, scoped, tag = 'output window, operand 0']
    %8 = vsyncpa [#allocation3], 0
    %s9 = scalar_lea.sflag [#allocation3], 1
    %10 = vsyncpa %s9, 0
    %11 = vsyncpa [#allocation6], 0
    %s12 = scalar_lea.sflag [#allocation6], 1
    %13 = vsyncpa %s12, 0
    %14 = vsyncpa [#allocation4], 0
    %s15 = scalar_lea.sflag [#allocation4], 1
    %16 = vsyncpa %s15, 0
    loop: start=0, step=1, limit=4
    $region2: #{tpu_custom_call.1} parent=1 // loop_pre_header
      _
    $region3: #{tpu_custom_call.1} parent=1 // loop_header
      %s18 = sphi 0, %s22
      %p19 = scmp.ge.s32.totalorder %s18, 4
      %s25 = sphi 0, %s37
      %s26 = sphi 0, %s33
      %s27 = sphi 0, %s25
      %s28 = sphi 0, %s26
      %s29 = sphi 0, %s27
      %s30 = sphi 0, %s28
      %s46 = sphi 0, %s48
      %s49 = sphi 0, %s46
      %s50 = sphi 0, %s49
      %s66 = sphi 0, %s50
      %s78 = sphi 0, %s80
      %s81 = sphi 0, %s78
      %s82 = sphi 0, %s81
      %s98 = sphi 0, %s82
      %s110 = sphi 0, %s112
      %s113 = sphi 0, %s110
      %s114 = sphi 0, %s113
      %s130 = sphi 0, %s114
      %s136 = sphi 0, %s138
      %s139 = sphi 0, %s136
      %s140 = sphi 0, %s139
      %s156 = sphi 0, %s140
    $region4: #{tpu_custom_call.1} parent=1 // loop_header_branch
      %21 = sbr.rel (%p19) target = $region8
    $region5: #{tpu_custom_call.1} parent=1 // loop_body
      %s23 = ssub.s32 %s18, 1
      %s24 = ssub.s32 %s18, 2
      %s31 = sadd.s32 1, %s26
      %p32 = scmp.ge.s32.totalorder %s31, 1
      %s33 = scalar_select %p32, 0, %s31
      %s34 = sadd.s32 1, %s25
      %s35 = scalar_select %p32, %s34, %s25
      %p36 = scmp.ge.s32.totalorder %s35, 2
      %s37 = scalar_select %p36, 0, %s35
      %s38 = sadd.s32 %s25, %s26
      %p39 = scmp.lt.s32.totalorder %s38, 0
      %s40 = scalar_select %p39, %s38, 0
      %s41 = sadd.s32 %s37, %s33
      %p42 = scmp.lt.s32.totalorder %s41, 0
      %s43 = scalar_select %p42, %s41, 0
      %s44 = ssub.s32 %s40, %s43
      %p45 = scmp.eq.s32.totalorder %s44, 0
      %s47 = sadd.s32 %s46, 1
      %s48 = scalar_select %p45, %s46, %s47
      %p51 = pneg %p45
      %p52 = scmp.eq.s32.totalorder %s18, 1
      %p53 = por %p51, %p52
      %p54 = scmp.ne.s32.totalorder %s46, %s49
      %p55 = scmp.eq.s32.totalorder %s18, 0
      %p56 = por %p54, %p55
      %p57 = scmp.ne.s32.totalorder %s46, %s49
      %p58 = scmp.eq.s32.totalorder %s23, 1
      %p59 = por %p57, %p58
      %p60 = scmp.ne.s32.totalorder %s49, %s50
      %p61 = scmp.eq.s32.totalorder %s23, 0
      %p62 = por %p60, %p61
      %p63 = scmp.ne.s32.totalorder %s49, %s50
      %p64 = scmp.eq.s32.totalorder %s24, 1
      %p65 = por %p63, %p64
      %p67 = scmp.ne.s32.totalorder %s50, %s66
      %p68 = scmp.eq.s32.totalorder %s24, 0
      %p69 = por %p67, %p68
      %s70 = sadd.s32 %s25, %s26
      %p71 = scmp.lt.s32.totalorder %s70, 0
      %s72 = scalar_select %p71, %s70, 0
      %s73 = sadd.s32 %s37, %s33
      %p74 = scmp.lt.s32.totalorder %s73, 0
      %s75 = scalar_select %p74, %s73, 0
      %s76 = ssub.s32 %s72, %s75
      %p77 = scmp.eq.s32.totalorder %s76, 0
      %s79 = sadd.s32 %s78, 1
      %s80 = scalar_select %p77, %s78, %s79
      %p83 = pneg %p77
      %p84 = scmp.eq.s32.totalorder %s18, 1
      %p85 = por %p83, %p84
      %p86 = scmp.ne.s32.totalorder %s78, %s81
      %p87 = scmp.eq.s32.totalorder %s18, 0
      %p88 = por %p86, %p87
      %p89 = scmp.ne.s32.totalorder %s78, %s81
      %p90 = scmp.eq.s32.totalorder %s23, 1
      %p91 = por %p89, %p90
      %p92 = scmp.ne.s32.totalorder %s81, %s82
      %p93 = scmp.eq.s32.totalorder %s23, 0
      %p94 = por %p92, %p93
      %p95 = scmp.ne.s32.totalorder %s81, %s82
      %p96 = scmp.eq.s32.totalorder %s24, 1
      %p97 = por %p95, %p96
      %p99 = scmp.ne.s32.totalorder %s82, %s98
      %p100 = scmp.eq.s32.totalorder %s24, 0
      %p101 = por %p99, %p100
      %s102 = sadd.s32 %s25, %s26
      %p103 = scmp.lt.s32.totalorder %s102, 0
      %s104 = scalar_select %p103, %s102, 0
      %s105 = sadd.s32 %s37, %s33
      %p106 = scmp.lt.s32.totalorder %s105, 0
      %s107 = scalar_select %p106, %s105, 0
      %s108 = ssub.s32 %s104, %s107
      %p109 = scmp.eq.s32.totalorder %s108, 0
      %s111 = sadd.s32 %s110, 1
      %s112 = scalar_select %p109, %s110, %s111
      %p115 = pneg %p109
      %p116 = scmp.eq.s32.totalorder %s18, 1
      %p117 = por %p115, %p116
      %p118 = scmp.ne.s32.totalorder %s110, %s113
      %p119 = scmp.eq.s32.totalorder %s18, 0
      %p120 = por %p118, %p119
      %p121 = scmp.ne.s32.totalorder %s110, %s113
      %p122 = scmp.eq.s32.totalorder %s23, 1
      %p123 = por %p121, %p122
      %p124 = scmp.ne.s32.totalorder %s113, %s114
      %p125 = scmp.eq.s32.totalorder %s23, 0
      %p126 = por %p124, %p125
      %p127 = scmp.ne.s32.totalorder %s113, %s114
      %p128 = scmp.eq.s32.totalorder %s24, 1
      %p129 = por %p127, %p128
      %p131 = scmp.ne.s32.totalorder %s114, %s130
      %p132 = scmp.eq.s32.totalorder %s24, 0
      %p133 = por %p131, %p132
      %s134 = ssub.s32 %s25, %s37
      %p135 = scmp.eq.s32.totalorder %s134, 0
      %s137 = sadd.s32 %s136, 1
      %s138 = scalar_select %p135, %s136, %s137
      %p141 = pneg %p135
      %p142 = scmp.eq.s32.totalorder %s18, 1
      %p143 = por %p141, %p142
      %p144 = scmp.ne.s32.totalorder %s136, %s139
      %p145 = scmp.eq.s32.totalorder %s18, 0
      %p146 = por %p144, %p145
      %p147 = scmp.ne.s32.totalorder %s136, %s139
      %p148 = scmp.eq.s32.totalorder %s23, 1
      %p149 = por %p147, %p148
      %p150 = scmp.ne.s32.totalorder %s139, %s140
      %p151 = scmp.eq.s32.totalorder %s23, 0
      %p152 = por %p150, %p151
      %p153 = scmp.ne.s32.totalorder %s139, %s140
      %p154 = scmp.eq.s32.totalorder %s24, 1
      %p155 = por %p153, %p154
      %p157 = scmp.ne.s32.totalorder %s140, %s156
      %p158 = scmp.eq.s32.totalorder %s24, 0
      %p159 = por %p157, %p158
      %p160 = scmp.le.s32.totalorder 1, %s18
      %p161 = scmp.lt.s32.totalorder %s18, 3
      %p162 = pnand %p160, %p161
      %p163 = pneg %p162
      // Predicated region
      $region9: #{tpu_custom_call.1} parent=5 // pred_check
        _
      $region10: #{tpu_custom_call.1} parent=5 // pred_check_branch
        %165 = sbr.rel (%p162) target = $region12
      $region11: #{tpu_custom_call.1} parent=5 // pred_region
        %s166 = ssub.s32 %s18, 1
      $region12: #{tpu_custom_call.1} parent=5 // pred_fallthru
        _
      %p167 = scmp.lt.s32.totalorder %s18, 2
      // Predicated region
      $region13: #{tpu_custom_call.1} parent=5 // pred_check
        %p168 = pneg %p167
      $region14: #{tpu_custom_call.1} parent=5 // pred_check_branch
        %170 = sbr.rel (%p168) target = $region16
      $region15: #{tpu_custom_call.1} parent=5 // pred_region
        // Predicated region
        $region17: #{tpu_custom_call.1} parent=15 // pred_check
          %p171 = pneg %p56
        $region18: #{tpu_custom_call.1} parent=15 // pred_check_branch
          %173 = sbr.rel (%p171) target = $region20
        $region19: #{tpu_custom_call.1} parent=15 // pred_region
          %s174 = sand.u32 %s46, 1
          %s175 = scalar_lea.sflag [#allocation3], %s174
          %s176 = sand.u32 %s46, 1
          %s177 = smul.addr %s176, 256
          %s178 = scalar_lea.vmem [#allocation2], %s177
          %s179 = sadd.s32 %s25, %s26
          %p180 = scmp.lt.s32.totalorder %s179, 0
          %s181 = scalar_select %p180, %s179, 0
          %s182 = smul.u32 32, %s181
          %s184 = ssub.s32 4096, 4096
          %185 = vsyncadd %s175, %s184
          %s186 = smul.addr %s182, 2
          %s187 = smul.addr %s186, 128
          %s188 = scalar_lea.hbm %s0, %s187
          %s189 = sshll.u32 %s178, 4
          %s190 = int_to_ptr.vmem [resolvable:$true] %s189
          %195 = dma.hbm_to_vmem [thread:$0]  %s188, 4096, %s190, %s175, 256, 128, 8
        $region20: #{tpu_custom_call.1} parent=15 // pred_fallthru
          _
        // Predicated region
        $region21: #{tpu_custom_call.1} parent=15 // pred_check
          %p196 = pneg %p88
        $region22: #{tpu_custom_call.1} parent=15 // pred_check_branch
          %198 = sbr.rel (%p196) target = $region24
        $region23: #{tpu_custom_call.1} parent=15 // pred_region
          %s199 = sand.u32 %s18, 1
          %s200 = scalar_lea.sflag [#allocation6], %s199
          %s201 = sand.u32 %s78, 1
          %s202 = smul.addr %s201, 256
          %s203 = scalar_lea.vmem [#allocation5], %s202
          %s204 = sadd.s32 %s25, %s26
          %p205 = scmp.lt.s32.totalorder %s204, 0
          %s206 = scalar_select %p205, %s204, 0
          %s207 = smul.u32 32, %s206
          %s209 = ssub.s32 4096, 4096
          %210 = vsyncadd %s200, %s209
          %s211 = smul.addr %s207, 2
          %s212 = sadd.s32 1, %s211
          %s213 = smul.addr %s212, 128
          %s214 = scalar_lea.hbm %s1, %s213
          %s215 = sshll.u32 %s203, 4
          %s216 = int_to_ptr.vmem [resolvable:$true] %s215
          %221 = dma.hbm_to_vmem [thread:$0]  %s214, 4096, %s216, %s200, 256, 128, 8
        $region24: #{tpu_custom_call.1} parent=15 // pred_fallthru
          _
        // Predicated region
        $region25: #{tpu_custom_call.1} parent=15 // pred_check
          %p222 = pneg %p120
        $region26: #{tpu_custom_call.1} parent=15 // pred_check_branch
          %224 = sbr.rel (%p222) target = $region28
        $region27: #{tpu_custom_call.1} parent=15 // pred_region
          %s225 = sand.u32 %s18, 1
          %s226 = scalar_lea.sflag [#allocation6], %s225
          %s227 = sand.u32 %s110, 1
          %s228 = smul.addr %s227, 256
          %s229 = scalar_lea.vmem [#allocation7], %s228
          %s230 = sadd.s32 %s25, %s26
          %p231 = scmp.lt.s32.totalorder %s230, 0
          %s232 = scalar_select %p231, %s230, 0
          %s233 = smul.u32 32, %s232
          %s235 = ssub.s32 4096, 4096
          %236 = vsyncadd %s226, %s235
          %s237 = smul.addr %s233, 128
          %s238 = scalar_lea.hbm %s2, %s237
          %s239 = sshll.u32 %s229, 4
          %s240 = int_to_ptr.vmem [resolvable:$true] %s239
          %245 = dma.hbm_to_vmem [thread:$0]  %s238, 4096, %s240, %s226, 128, 128, 8
        $region28: #{tpu_custom_call.1} parent=15 // pred_fallthru
          _
      $region16: #{tpu_custom_call.1} parent=5 // pred_fallthru
        _
      %p246 = scmp.le.s32.totalorder 1, %s18
      %p247 = scmp.lt.s32.totalorder %s18, 3
      %p248 = pnand %p246, %p247
      %p249 = pneg %p248
      // Predicated region
      $region29: #{tpu_custom_call.1} parent=5 // pred_check
        _
      $region30: #{tpu_custom_call.1} parent=5 // pred_check_branch
        %251 = sbr.rel (%p248) target = $region32
      $region31: #{tpu_custom_call.1} parent=5 // pred_region
        %s252 = ssub.s32 %s18, 1
        %s253 = sand.u32 %s49, 1
        %s254 = scalar_lea.sflag [#allocation3], %s253
        %s255 = sand.u32 %s49, 1
        %s256 = smul.addr %s255, 256
        %s257 = scalar_lea.vmem [#allocation2], %s256
        // Predicated region
        $region33: #{tpu_custom_call.1} parent=31 // pred_check
          %p258 = pneg %p62
        $region34: #{tpu_custom_call.1} parent=31 // pred_check_branch
          %260 = sbr.rel (%p258) target = $region36
        $region35: #{tpu_custom_call.1} parent=31 // pred_region
          %261 = dma.done %s254, 4096
        $region36: #{tpu_custom_call.1} parent=31 // pred_fallthru
          _
        %s262 = sand.u32 %s23, 1
        %s263 = scalar_lea.sflag [#allocation6], %s262
        %s264 = sand.u32 %s81, 1
        %s265 = smul.addr %s264, 256
        %s266 = scalar_lea.vmem [#allocation5], %s265
        // Predicated region
        $region37: #{tpu_custom_call.1} parent=31 // pred_check
          %p267 = pneg %p94
        $region38: #{tpu_custom_call.1} parent=31 // pred_check_branch
          %269 = sbr.rel (%p267) target = $region40
        $region39: #{tpu_custom_call.1} parent=31 // pred_region
          %270 = dma.done %s263, 4096
        $region40: #{tpu_custom_call.1} parent=31 // pred_fallthru
          _
        %s271 = sand.u32 %s23, 1
        %s272 = scalar_lea.sflag [#allocation6], %s271
        %s273 = sand.u32 %s113, 1
        %s274 = smul.addr %s273, 256
        %s275 = scalar_lea.vmem [#allocation7], %s274
        // Predicated region
        $region41: #{tpu_custom_call.1} parent=31 // pred_check
          %p276 = pneg %p126
        $region42: #{tpu_custom_call.1} parent=31 // pred_check_branch
          %278 = sbr.rel (%p276) target = $region44
        $region43: #{tpu_custom_call.1} parent=31 // pred_region
          %279 = dma.done %s272, 4096
        $region44: #{tpu_custom_call.1} parent=31 // pred_fallthru
          _
        %s280 = sand.u32 %s49, 1
        %s281 = scalar_lea.sflag [#allocation3], %s280
        %s282 = sand.u32 %s49, 1
        %s283 = smul.addr %s282, 256
        %s284 = scalar_lea.vmem [#allocation2], %s283
        %p285 = pneg %p62
        %p286 = pneg %p59
        %s287 = sand.u32 %s23, 1
        %s288 = scalar_lea.sflag [#allocation6], %s287
        %s289 = sand.u32 %s81, 1
        %s290 = smul.addr %s289, 256
        %s291 = scalar_lea.vmem [#allocation5], %s290
        %p292 = pneg %p94
        %p293 = pneg %p91
        %s294 = sand.u32 %s23, 1
        %s295 = scalar_lea.sflag [#allocation6], %s294
        %s296 = sand.u32 %s113, 1
        %s297 = smul.addr %s296, 256
        %s298 = scalar_lea.vmem [#allocation7], %s297
        %p299 = pneg %p126
        %p300 = pneg %p123
        %p301 = pneg %p152
        %p302 = pneg %p149
        %s303 = sand.u32 %s139, 1
        %s304 = scalar_lea.sflag [#allocation4], %s303
        %s305 = sand.u32 %s139, 1
        %s306 = smul.addr %s305, 8
        %s307 = scalar_lea.vmem [#allocation8], %s306
        %s308 = sadd.s32 %s27, %s28
        %p309 = scmp.lt.s32.totalorder %s308, 0
        %s310 = scalar_select %p309, %s308, 0
        %s311 = smul.u32 32, %s310
        %s312 = sadd.s32 %s27, %s28
        %p313 = scmp.lt.s32.totalorder %s312, 0
        %s314 = scalar_select %p313, %s312, 0
        %s315 = smul.u32 32, %s314
        %s316 = sadd.s32 %s27, %s28
        %p317 = scmp.lt.s32.totalorder %s316, 0
        %s318 = scalar_select %p317, %s316, 0
        %s319 = smul.u32 32, %s318
        %v320 = vld [vmem:[%s257] sm:$0xff]
        %v321 = vld [vmem:[%s257 + $0x8] sm:$0xff]
        %v322 = vld [vmem:[%s257 + $0x10] sm:$0xff]
        %v323 = vld [vmem:[%s257 + $0x18] sm:$0xff]
        %v324 = vld [vmem:[%s257 + $0x20] sm:$0xff]
        %v325 = vld [vmem:[%s257 + $0x28] sm:$0xff]
        %v326 = vld [vmem:[%s257 + $0x30] sm:$0xff]
        %v327 = vld [vmem:[%s257 + $0x38] sm:$0xff]
        %v328 = vld [vmem:[%s257 + $0x40] sm:$0xff]
        %v329 = vld [vmem:[%s257 + $0x48] sm:$0xff]
        %v330 = vld [vmem:[%s257 + $0x50] sm:$0xff]
        %v331 = vld [vmem:[%s257 + $0x58] sm:$0xff]
        %v332 = vld [vmem:[%s257 + $0x60] sm:$0xff]
        %v333 = vld [vmem:[%s257 + $0x68] sm:$0xff]
        %v334 = vld [vmem:[%s257 + $0x70] sm:$0xff]
        %v335 = vld [vmem:[%s257 + $0x78] sm:$0xff]
        %v336 = vld [vmem:[%s257 + $0x80] sm:$0xff]
        %v337 = vld [vmem:[%s257 + $0x88] sm:$0xff]
        %v338 = vld [vmem:[%s257 + $0x90] sm:$0xff]
        %v339 = vld [vmem:[%s257 + $0x98] sm:$0xff]
        %v340 = vld [vmem:[%s257 + $0xa0] sm:$0xff]
        %v341 = vld [vmem:[%s257 + $0xa8] sm:$0xff]
        %v342 = vld [vmem:[%s257 + $0xb0] sm:$0xff]
        %v343 = vld [vmem:[%s257 + $0xb8] sm:$0xff]
        %v344 = vld [vmem:[%s257 + $0xc0] sm:$0xff]
        %v345 = vld [vmem:[%s257 + $0xc8] sm:$0xff]
        %v346 = vld [vmem:[%s257 + $0xd0] sm:$0xff]
        %v347 = vld [vmem:[%s257 + $0xd8] sm:$0xff]
        %v348 = vld [vmem:[%s257 + $0xe0] sm:$0xff]
        %v349 = vld [vmem:[%s257 + $0xe8] sm:$0xff]
        %v350 = vld [vmem:[%s257 + $0xf0] sm:$0xff]
        %v351 = vld [vmem:[%s257 + $0xf8] sm:$0xff]
        %v352 = vld [vmem:[%s266] sm:$0xff]
        %v353 = vld [vmem:[%s266 + $0x8] sm:$0xff]
        %v354 = vld [vmem:[%s266 + $0x10] sm:$0xff]
        %v355 = vld [vmem:[%s266 + $0x18] sm:$0xff]
        %v356 = vld [vmem:[%s266 + $0x20] sm:$0xff]
        %v357 = vld [vmem:[%s266 + $0x28] sm:$0xff]
        %v358 = vld [vmem:[%s266 + $0x30] sm:$0xff]
        %v359 = vld [vmem:[%s266 + $0x38] sm:$0xff]
        %v360 = vld [vmem:[%s266 + $0x40] sm:$0xff]
        %v361 = vld [vmem:[%s266 + $0x48] sm:$0xff]
        %v362 = vld [vmem:[%s266 + $0x50] sm:$0xff]
        %v363 = vld [vmem:[%s266 + $0x58] sm:$0xff]
        %v364 = vld [vmem:[%s266 + $0x60] sm:$0xff]
        %v365 = vld [vmem:[%s266 + $0x68] sm:$0xff]
        %v366 = vld [vmem:[%s266 + $0x70] sm:$0xff]
        %v367 = vld [vmem:[%s266 + $0x78] sm:$0xff]
        %v368 = vld [vmem:[%s266 + $0x80] sm:$0xff]
        %v369 = vld [vmem:[%s266 + $0x88] sm:$0xff]
        %v370 = vld [vmem:[%s266 + $0x90] sm:$0xff]
        %v371 = vld [vmem:[%s266 + $0x98] sm:$0xff]
        %v372 = vld [vmem:[%s266 + $0xa0] sm:$0xff]
        %v373 = vld [vmem:[%s266 + $0xa8] sm:$0xff]
        %v374 = vld [vmem:[%s266 + $0xb0] sm:$0xff]
        %v375 = vld [vmem:[%s266 + $0xb8] sm:$0xff]
        %v376 = vld [vmem:[%s266 + $0xc0] sm:$0xff]
        %v377 = vld [vmem:[%s266 + $0xc8] sm:$0xff]
        %v378 = vld [vmem:[%s266 + $0xd0] sm:$0xff]
        %v379 = vld [vmem:[%s266 + $0xd8] sm:$0xff]
        %v380 = vld [vmem:[%s266 + $0xe0] sm:$0xff]
        %v381 = vld [vmem:[%s266 + $0xe8] sm:$0xff]
        %v382 = vld [vmem:[%s266 + $0xf0] sm:$0xff]
        %v383 = vld [vmem:[%s266 + $0xf8] sm:$0xff]
        %p384 = scmp.eq.s32.totalorder %s28, 0
        // Predicated region
        $region45: #{tpu_custom_call.1} parent=31 // pred_check
          %p385 = pneg %p384
        $region46: #{tpu_custom_call.1} parent=31 // pred_check_branch
          %387 = sbr.rel (%p385) target = $region48
        $region47: #{tpu_custom_call.1} parent=31 // pred_region
          %388 = vst [vmem:[%s307] sm:$0xff] 0.0
        $region48: #{tpu_custom_call.1} parent=31 // pred_fallthru
          _
        %v389 = vld [vmem:[%s275] sm:$0xff]
        %v390 = vld [vmem:[%s275 + $0x8] sm:$0xff]
        %v391 = vld [vmem:[%s275 + $0x10] sm:$0xff]
        %v392 = vld [vmem:[%s275 + $0x18] sm:$0xff]
        %v393 = vld [vmem:[%s275 + $0x20] sm:$0xff]
        %v394 = vld [vmem:[%s275 + $0x28] sm:$0xff]
        %v395 = vld [vmem:[%s275 + $0x30] sm:$0xff]
        %v396 = vld [vmem:[%s275 + $0x38] sm:$0xff]
        %v397 = vld [vmem:[%s275 + $0x40] sm:$0xff]
        %v398 = vld [vmem:[%s275 + $0x48] sm:$0xff]
        %v399 = vld [vmem:[%s275 + $0x50] sm:$0xff]
        %v400 = vld [vmem:[%s275 + $0x58] sm:$0xff]
        %v401 = vld [vmem:[%s275 + $0x60] sm:$0xff]
        %v402 = vld [vmem:[%s275 + $0x68] sm:$0xff]
        %v403 = vld [vmem:[%s275 + $0x70] sm:$0xff]
        %v404 = vld [vmem:[%s275 + $0x78] sm:$0xff]
        %v405 = vld [vmem:[%s275 + $0x80] sm:$0xff]
        %v406 = vld [vmem:[%s275 + $0x88] sm:$0xff]
        %v407 = vld [vmem:[%s275 + $0x90] sm:$0xff]
        %v408 = vld [vmem:[%s275 + $0x98] sm:$0xff]
        %v409 = vld [vmem:[%s275 + $0xa0] sm:$0xff]
        %v410 = vld [vmem:[%s275 + $0xa8] sm:$0xff]
        %v411 = vld [vmem:[%s275 + $0xb0] sm:$0xff]
        %v412 = vld [vmem:[%s275 + $0xb8] sm:$0xff]
        %v413 = vld [vmem:[%s275 + $0xc0] sm:$0xff]
        %v414 = vld [vmem:[%s275 + $0xc8] sm:$0xff]
        %v415 = vld [vmem:[%s275 + $0xd0] sm:$0xff]
        %v416 = vld [vmem:[%s275 + $0xd8] sm:$0xff]
        %v417 = vld [vmem:[%s275 + $0xe0] sm:$0xff]
        %v418 = vld [vmem:[%s275 + $0xe8] sm:$0xff]
        %v419 = vld [vmem:[%s275 + $0xf0] sm:$0xff]
        %v420 = vld [vmem:[%s275 + $0xf8] sm:$0xff]
        %v421 = vmax.f32 %v352, 1e-06
        %v422 = vmax.f32 %v353, 1e-06
        %v423 = vmax.f32 %v354, 1e-06
        %v424 = vmax.f32 %v355, 1e-06
        %v425 = vmax.f32 %v356, 1e-06
        %v426 = vmax.f32 %v357, 1e-06
        %v427 = vmax.f32 %v358, 1e-06
        %v428 = vmax.f32 %v359, 1e-06
        %v429 = vmax.f32 %v360, 1e-06
        %v430 = vmax.f32 %v361, 1e-06
        %v431 = vmax.f32 %v362, 1e-06
        %v432 = vmax.f32 %v363, 1e-06
        %v433 = vmax.f32 %v364, 1e-06
        %v434 = vmax.f32 %v365, 1e-06
        %v435 = vmax.f32 %v366, 1e-06
        %v436 = vmax.f32 %v367, 1e-06
        %v437 = vmax.f32 %v368, 1e-06
        %v438 = vmax.f32 %v369, 1e-06
        %v439 = vmax.f32 %v370, 1e-06
        %v440 = vmax.f32 %v371, 1e-06
        %v441 = vmax.f32 %v372, 1e-06
        %v442 = vmax.f32 %v373, 1e-06
        %v443 = vmax.f32 %v374, 1e-06
        %v444 = vmax.f32 %v375, 1e-06
        %v445 = vmax.f32 %v376, 1e-06
        %v446 = vmax.f32 %v377, 1e-06
        %v447 = vmax.f32 %v378, 1e-06
        %v448 = vmax.f32 %v379, 1e-06
        %v449 = vmax.f32 %v380, 1e-06
        %v450 = vmax.f32 %v381, 1e-06
        %v451 = vmax.f32 %v382, 1e-06
        %v452 = vmax.f32 %v383, 1e-06
        %v453 = vrcp.pop %v421
        %v454 = vrcp.pop %v422
        %v455 = vrcp.pop %v423
        %v456 = vrcp.pop %v424
        %v457 = vrcp.pop %v425
        %v458 = vrcp.pop %v426
        %v459 = vrcp.pop %v427
        %v460 = vrcp.pop %v428
        %v461 = vrcp.pop %v429
        %v462 = vrcp.pop %v430
        %v463 = vrcp.pop %v431
        %v464 = vrcp.pop %v432
        %v465 = vrcp.pop %v433
        %v466 = vrcp.pop %v434
        %v467 = vrcp.pop %v435
        %v468 = vrcp.pop %v436
        %v469 = vrcp.pop %v437
        %v470 = vrcp.pop %v438
        %v471 = vrcp.pop %v439
        %v472 = vrcp.pop %v440
        %v473 = vrcp.pop %v441
        %v474 = vrcp.pop %v442
        %v475 = vrcp.pop %v443
        %v476 = vrcp.pop %v444
        %v477 = vrcp.pop %v445
        %v478 = vrcp.pop %v446
        %v479 = vrcp.pop %v447
        %v480 = vrcp.pop %v448
        %v481 = vrcp.pop %v449
        %v482 = vrcp.pop %v450
        %v483 = vrcp.pop %v451
        %v484 = vrcp.pop %v452
        %v485 = vmul.f32 %v421, %v453
        %v486 = vmul.f32 %v422, %v454
        %v487 = vmul.f32 %v423, %v455
        %v488 = vmul.f32 %v424, %v456
        %v489 = vmul.f32 %v425, %v457
        %v490 = vmul.f32 %v426, %v458
        %v491 = vmul.f32 %v427, %v459
        %v492 = vmul.f32 %v428, %v460
        %v493 = vmul.f32 %v429, %v461
        %v494 = vmul.f32 %v430, %v462
        %v495 = vmul.f32 %v431, %v463
        %v496 = vmul.f32 %v432, %v464
        %v497 = vmul.f32 %v433, %v465
        %v498 = vmul.f32 %v434, %v466
        %v499 = vmul.f32 %v435, %v467
        %v500 = vmul.f32 %v436, %v468
        %v501 = vmul.f32 %v437, %v469
        %v502 = vmul.f32 %v438, %v470
        %v503 = vmul.f32 %v439, %v471
        %v504 = vmul.f32 %v440, %v472
        %v505 = vmul.f32 %v441, %v473
        %v506 = vmul.f32 %v442, %v474
        %v507 = vmul.f32 %v443, %v475
        %v508 = vmul.f32 %v444, %v476
        %v509 = vmul.f32 %v445, %v477
        %v510 = vmul.f32 %v446, %v478
        %v511 = vmul.f32 %v447, %v479
        %v512 = vmul.f32 %v448, %v480
        %v513 = vmul.f32 %v449, %v481
        %v514 = vmul.f32 %v450, %v482
        %v515 = vmul.f32 %v451, %v483
        %v516 = vmul.f32 %v452, %v484
        %v517 = vsub.f32 2.0, %v485
        %v518 = vsub.f32 2.0, %v486
        %v519 = vsub.f32 2.0, %v487
        %v520 = vsub.f32 2.0, %v488
        %v521 = vsub.f32 2.0, %v489
        %v522 = vsub.f32 2.0, %v490
        %v523 = vsub.f32 2.0, %v491
        %v524 = vsub.f32 2.0, %v492
        %v525 = vsub.f32 2.0, %v493
        %v526 = vsub.f32 2.0, %v494
        %v527 = vsub.f32 2.0, %v495
        %v528 = vsub.f32 2.0, %v496
        %v529 = vsub.f32 2.0, %v497
        %v530 = vsub.f32 2.0, %v498
        %v531 = vsub.f32 2.0, %v499
        %v532 = vsub.f32 2.0, %v500
        %v533 = vsub.f32 2.0, %v501
        %v534 = vsub.f32 2.0, %v502
        %v535 = vsub.f32 2.0, %v503
        %v536 = vsub.f32 2.0, %v504
        %v537 = vsub.f32 2.0, %v505
        %v538 = vsub.f32 2.0, %v506
        %v539 = vsub.f32 2.0, %v507
        %v540 = vsub.f32 2.0, %v508
        %v541 = vsub.f32 2.0, %v509
        %v542 = vsub.f32 2.0, %v510
        %v543 = vsub.f32 2.0, %v511
        %v544 = vsub.f32 2.0, %v512
        %v545 = vsub.f32 2.0, %v513
        %v546 = vsub.f32 2.0, %v514
        %v547 = vsub.f32 2.0, %v515
        %v548 = vsub.f32 2.0, %v516
        %v549 = vmul.f32 %v453, %v517
        %v550 = vmul.f32 %v454, %v518
        %v551 = vmul.f32 %v455, %v519
        %v552 = vmul.f32 %v456, %v520
        %v553 = vmul.f32 %v457, %v521
        %v554 = vmul.f32 %v458, %v522
        %v555 = vmul.f32 %v459, %v523
        %v556 = vmul.f32 %v460, %v524
        %v557 = vmul.f32 %v461, %v525
        %v558 = vmul.f32 %v462, %v526
        %v559 = vmul.f32 %v463, %v527
        %v560 = vmul.f32 %v464, %v528
        %v561 = vmul.f32 %v465, %v529
        %v562 = vmul.f32 %v466, %v530
        %v563 = vmul.f32 %v467, %v531
        %v564 = vmul.f32 %v468, %v532
        %v565 = vmul.f32 %v469, %v533
        %v566 = vmul.f32 %v470, %v534
        %v567 = vmul.f32 %v471, %v535
        %v568 = vmul.f32 %v472, %v536
        %v569 = vmul.f32 %v473, %v537
        %v570 = vmul.f32 %v474, %v538
        %v571 = vmul.f32 %v475, %v539
        %v572 = vmul.f32 %v476, %v540
        %v573 = vmul.f32 %v477, %v541
        %v574 = vmul.f32 %v478, %v542
        %v575 = vmul.f32 %v479, %v543
        %v576 = vmul.f32 %v480, %v544
        %v577 = vmul.f32 %v481, %v545
        %v578 = vmul.f32 %v482, %v546
        %v579 = vmul.f32 %v483, %v547
        %v580 = vmul.f32 %v484, %v548
        %v581 = vlog2.pop %v421
        %v582 = vmul.f32 %v581, 0.6931472
        %v583 = vlog2.pop %v422
        %v584 = vmul.f32 %v583, 0.6931472
        %v585 = vlog2.pop %v423
        %v586 = vmul.f32 %v585, 0.6931472
        %v587 = vlog2.pop %v424
        %v588 = vmul.f32 %v587, 0.6931472
        %v589 = vlog2.pop %v425
        %v590 = vmul.f32 %v589, 0.6931472
        %v591 = vlog2.pop %v426
        %v592 = vmul.f32 %v591, 0.6931472
        %v593 = vlog2.pop %v427
        %v594 = vmul.f32 %v593, 0.6931472
        %v595 = vlog2.pop %v428
        %v596 = vmul.f32 %v595, 0.6931472
        %v597 = vlog2.pop %v429
        %v598 = vmul.f32 %v597, 0.6931472
        %v599 = vlog2.pop %v430
        %v600 = vmul.f32 %v599, 0.6931472
        %v601 = vlog2.pop %v431
        %v602 = vmul.f32 %v601, 0.6931472
        %v603 = vlog2.pop %v432
        %v604 = vmul.f32 %v603, 0.6931472
        %v605 = vlog2.pop %v433
        %v606 = vmul.f32 %v605, 0.6931472
        %v607 = vlog2.pop %v434
        %v608 = vmul.f32 %v607, 0.6931472
        %v609 = vlog2.pop %v435
        %v610 = vmul.f32 %v609, 0.6931472
        %v611 = vlog2.pop %v436
        %v612 = vmul.f32 %v611, 0.6931472
        %v613 = vlog2.pop %v437
        %v614 = vmul.f32 %v613, 0.6931472
        %v615 = vlog2.pop %v438
        %v616 = vmul.f32 %v615, 0.6931472
        %v617 = vlog2.pop %v439
        %v618 = vmul.f32 %v617, 0.6931472
        %v619 = vlog2.pop %v440
        %v620 = vmul.f32 %v619, 0.6931472
        %v621 = vlog2.pop %v441
        %v622 = vmul.f32 %v621, 0.6931472
        %v623 = vlog2.pop %v442
        %v624 = vmul.f32 %v623, 0.6931472
        %v625 = vlog2.pop %v443
        %v626 = vmul.f32 %v625, 0.6931472
        %v627 = vlog2.pop %v444
        %v628 = vmul.f32 %v627, 0.6931472
        %v629 = vlog2.pop %v445
        %v630 = vmul.f32 %v629, 0.6931472
        %v631 = vlog2.pop %v446
        %v632 = vmul.f32 %v631, 0.6931472
        %v633 = vlog2.pop %v447
        %v634 = vmul.f32 %v633, 0.6931472
        %v635 = vlog2.pop %v448
        %v636 = vmul.f32 %v635, 0.6931472
        %v637 = vlog2.pop %v449
        %v638 = vmul.f32 %v637, 0.6931472
        %v639 = vlog2.pop %v450
        %v640 = vmul.f32 %v639, 0.6931472
        %v641 = vlog2.pop %v451
        %v642 = vmul.f32 %v641, 0.6931472
        %v643 = vlog2.pop %v452
        %v644 = vmul.f32 %v643, 0.6931472
        %v645 = vadd.f32 %v582, 0.6931472
        %v646 = vadd.f32 %v584, 0.6931472
        %v647 = vadd.f32 %v586, 0.6931472
        %v648 = vadd.f32 %v588, 0.6931472
        %v649 = vadd.f32 %v590, 0.6931472
        %v650 = vadd.f32 %v592, 0.6931472
        %v651 = vadd.f32 %v594, 0.6931472
        %v652 = vadd.f32 %v596, 0.6931472
        %v653 = vadd.f32 %v598, 0.6931472
        %v654 = vadd.f32 %v600, 0.6931472
        %v655 = vadd.f32 %v602, 0.6931472
        %v656 = vadd.f32 %v604, 0.6931472
        %v657 = vadd.f32 %v606, 0.6931472
        %v658 = vadd.f32 %v608, 0.6931472
        %v659 = vadd.f32 %v610, 0.6931472
        %v660 = vadd.f32 %v612, 0.6931472
        %v661 = vadd.f32 %v614, 0.6931472
        %v662 = vadd.f32 %v616, 0.6931472
        %v663 = vadd.f32 %v618, 0.6931472
        %v664 = vadd.f32 %v620, 0.6931472
        %v665 = vadd.f32 %v622, 0.6931472
        %v666 = vadd.f32 %v624, 0.6931472
        %v667 = vadd.f32 %v626, 0.6931472
        %v668 = vadd.f32 %v628, 0.6931472
        %v669 = vadd.f32 %v630, 0.6931472
        %v670 = vadd.f32 %v632, 0.6931472
        %v671 = vadd.f32 %v634, 0.6931472
        %v672 = vadd.f32 %v636, 0.6931472
        %v673 = vadd.f32 %v638, 0.6931472
        %v674 = vadd.f32 %v640, 0.6931472
        %v675 = vadd.f32 %v642, 0.6931472
        %v676 = vadd.f32 %v644, 0.6931472
        %v677 = vsub.f32 %v389, %v320
        %v678 = vsub.f32 %v390, %v321
        %v679 = vsub.f32 %v391, %v322
        %v680 = vsub.f32 %v392, %v323
        %v681 = vsub.f32 %v393, %v324
        %v682 = vsub.f32 %v394, %v325
        %v683 = vsub.f32 %v395, %v326
        %v684 = vsub.f32 %v396, %v327
        %v685 = vsub.f32 %v397, %v328
        %v686 = vsub.f32 %v398, %v329
        %v687 = vsub.f32 %v399, %v330
        %v688 = vsub.f32 %v400, %v331
        %v689 = vsub.f32 %v401, %v332
        %v690 = vsub.f32 %v402, %v333
        %v691 = vsub.f32 %v403, %v334
        %v692 = vsub.f32 %v404, %v335
        %v693 = vsub.f32 %v405, %v336
        %v694 = vsub.f32 %v406, %v337
        %v695 = vsub.f32 %v407, %v338
        %v696 = vsub.f32 %v408, %v339
        %v697 = vsub.f32 %v409, %v340
        %v698 = vsub.f32 %v410, %v341
        %v699 = vsub.f32 %v411, %v342
        %v700 = vsub.f32 %v412, %v343
        %v701 = vsub.f32 %v413, %v344
        %v702 = vsub.f32 %v414, %v345
        %v703 = vsub.f32 %v415, %v346
        %v704 = vsub.f32 %v416, %v347
        %v705 = vsub.f32 %v417, %v348
        %v706 = vsub.f32 %v418, %v349
        %v707 = vsub.f32 %v419, %v350
        %v708 = vsub.f32 %v420, %v351
        %v709 = vand.u32 2147483647, %v677
        %v710 = vand.u32 2147483647, %v678
        %v711 = vand.u32 2147483647, %v679
        %v712 = vand.u32 2147483647, %v680
        %v713 = vand.u32 2147483647, %v681
        %v714 = vand.u32 2147483647, %v682
        %v715 = vand.u32 2147483647, %v683
        %v716 = vand.u32 2147483647, %v684
        %v717 = vand.u32 2147483647, %v685
        %v718 = vand.u32 2147483647, %v686
        %v719 = vand.u32 2147483647, %v687
        %v720 = vand.u32 2147483647, %v688
        %v721 = vand.u32 2147483647, %v689
        %v722 = vand.u32 2147483647, %v690
        %v723 = vand.u32 2147483647, %v691
        %v724 = vand.u32 2147483647, %v692
        %v725 = vand.u32 2147483647, %v693
        %v726 = vand.u32 2147483647, %v694
        %v727 = vand.u32 2147483647, %v695
        %v728 = vand.u32 2147483647, %v696
        %v729 = vand.u32 2147483647, %v697
        %v730 = vand.u32 2147483647, %v698
        %v731 = vand.u32 2147483647, %v699
        %v732 = vand.u32 2147483647, %v700
        %v733 = vand.u32 2147483647, %v701
        %v734 = vand.u32 2147483647, %v702
        %v735 = vand.u32 2147483647, %v703
        %v736 = vand.u32 2147483647, %v704
        %v737 = vand.u32 2147483647, %v705
        %v738 = vand.u32 2147483647, %v706
        %v739 = vand.u32 2147483647, %v707
        %v740 = vand.u32 2147483647, %v708
        %v741 = vmul.f32 %v709, %v549
        %v742 = vmul.f32 %v710, %v550
        %v743 = vmul.f32 %v711, %v551
        %v744 = vmul.f32 %v712, %v552
        %v745 = vmul.f32 %v713, %v553
        %v746 = vmul.f32 %v714, %v554
        %v747 = vmul.f32 %v715, %v555
        %v748 = vmul.f32 %v716, %v556
        %v749 = vmul.f32 %v717, %v557
        %v750 = vmul.f32 %v718, %v558
        %v751 = vmul.f32 %v719, %v559
        %v752 = vmul.f32 %v720, %v560
        %v753 = vmul.f32 %v721, %v561
        %v754 = vmul.f32 %v722, %v562
        %v755 = vmul.f32 %v723, %v563
        %v756 = vmul.f32 %v724, %v564
        %v757 = vmul.f32 %v725, %v565
        %v758 = vmul.f32 %v726, %v566
        %v759 = vmul.f32 %v727, %v567
        %v760 = vmul.f32 %v728, %v568
        %v761 = vmul.f32 %v729, %v569
        %v762 = vmul.f32 %v730, %v570
        %v763 = vmul.f32 %v731, %v571
        %v764 = vmul.f32 %v732, %v572
        %v765 = vmul.f32 %v733, %v573
        %v766 = vmul.f32 %v734, %v574
        %v767 = vmul.f32 %v735, %v575
        %v768 = vmul.f32 %v736, %v576
        %v769 = vmul.f32 %v737, %v577
        %v770 = vmul.f32 %v738, %v578
        %v771 = vmul.f32 %v739, %v579
        %v772 = vmul.f32 %v740, %v580
        %v773 = vadd.f32 %v645, %v741
        %v774 = vadd.f32 %v646, %v742
        %v775 = vadd.f32 %v647, %v743
        %v776 = vadd.f32 %v648, %v744
        %v777 = vadd.f32 %v649, %v745
        %v778 = vadd.f32 %v650, %v746
        %v779 = vadd.f32 %v651, %v747
        %v780 = vadd.f32 %v652, %v748
        %v781 = vadd.f32 %v653, %v749
        %v782 = vadd.f32 %v654, %v750
        %v783 = vadd.f32 %v655, %v751
        %v784 = vadd.f32 %v656, %v752
        %v785 = vadd.f32 %v657, %v753
        %v786 = vadd.f32 %v658, %v754
        %v787 = vadd.f32 %v659, %v755
        %v788 = vadd.f32 %v660, %v756
        %v789 = vadd.f32 %v661, %v757
        %v790 = vadd.f32 %v662, %v758
        %v791 = vadd.f32 %v663, %v759
        %v792 = vadd.f32 %v664, %v760
        %v793 = vadd.f32 %v665, %v761
        %v794 = vadd.f32 %v666, %v762
        %v795 = vadd.f32 %v667, %v763
        %v796 = vadd.f32 %v668, %v764
        %v797 = vadd.f32 %v669, %v765
        %v798 = vadd.f32 %v670, %v766
        %v799 = vadd.f32 %v671, %v767
        %v800 = vadd.f32 %v672, %v768
        %v801 = vadd.f32 %v673, %v769
        %v802 = vadd.f32 %v674, %v770
        %v803 = vadd.f32 %v675, %v771
        %v804 = vadd.f32 %v676, %v772
        %s805 = sadd.s32 %s27, %s28
        %s806 = smul.u32 %s805, 256
        %s807 = ssub.s32 256, %s806
        %v808 = vlaneseq
        %v809 = vshrl.u32 %v808, 7
        %v810 = vadd.s32 %v809, 8
        %v811 = vadd.s32 %v809, 16
        %v812 = vadd.s32 %v809, 24
        %v813 = vadd.s32 %v809, 32
        %v814 = vadd.s32 %v809, 40
        %v815 = vadd.s32 %v809, 48
        %v816 = vadd.s32 %v809, 56
        %v817 = vadd.s32 %v809, 64
        %v818 = vadd.s32 %v809, 72
        %v819 = vadd.s32 %v809, 80
        %v820 = vadd.s32 %v809, 88
        %v821 = vadd.s32 %v809, 96
        %v822 = vadd.s32 %v809, 104
        %v823 = vadd.s32 %v809, 112
        %v824 = vadd.s32 %v809, 120
        %v825 = vadd.s32 %v809, 128
        %v826 = vadd.s32 %v809, 136
        %v827 = vadd.s32 %v809, 144
        %v828 = vadd.s32 %v809, 152
        %v829 = vadd.s32 %v809, 160
        %v830 = vadd.s32 %v809, 168
        %v831 = vadd.s32 %v809, 176
        %v832 = vadd.s32 %v809, 184
        %v833 = vadd.s32 %v809, 192
        %v834 = vadd.s32 %v809, 200
        %v835 = vadd.s32 %v809, 208
        %v836 = vadd.s32 %v809, 216
        %v837 = vadd.s32 %v809, 224
        %v838 = vadd.s32 %v809, 232
        %v839 = vadd.s32 %v809, 240
        %v840 = vadd.s32 %v809, 248
        %v841 = vstv %s807
        %vm842 = vcmp.lt.s32.totalorder %v809, %v841
        %vm843 = vcmp.lt.s32.totalorder %v810, %v841
        %vm844 = vcmp.lt.s32.totalorder %v811, %v841
        %vm845 = vcmp.lt.s32.totalorder %v812, %v841
        %vm846 = vcmp.lt.s32.totalorder %v813, %v841
        %vm847 = vcmp.lt.s32.totalorder %v814, %v841
        %vm848 = vcmp.lt.s32.totalorder %v815, %v841
        %vm849 = vcmp.lt.s32.totalorder %v816, %v841
        %vm850 = vcmp.lt.s32.totalorder %v817, %v841
        %vm851 = vcmp.lt.s32.totalorder %v818, %v841
        %vm852 = vcmp.lt.s32.totalorder %v819, %v841
        %vm853 = vcmp.lt.s32.totalorder %v820, %v841
        %vm854 = vcmp.lt.s32.totalorder %v821, %v841
        %vm855 = vcmp.lt.s32.totalorder %v822, %v841
        %vm856 = vcmp.lt.s32.totalorder %v823, %v841
        %vm857 = vcmp.lt.s32.totalorder %v824, %v841
        %vm858 = vcmp.lt.s32.totalorder %v825, %v841
        %vm859 = vcmp.lt.s32.totalorder %v826, %v841
        %vm860 = vcmp.lt.s32.totalorder %v827, %v841
        %vm861 = vcmp.lt.s32.totalorder %v828, %v841
        %vm862 = vcmp.lt.s32.totalorder %v829, %v841
        %vm863 = vcmp.lt.s32.totalorder %v830, %v841
        %vm864 = vcmp.lt.s32.totalorder %v831, %v841
        %vm865 = vcmp.lt.s32.totalorder %v832, %v841
        %vm866 = vcmp.lt.s32.totalorder %v833, %v841
        %vm867 = vcmp.lt.s32.totalorder %v834, %v841
        %vm868 = vcmp.lt.s32.totalorder %v835, %v841
        %vm869 = vcmp.lt.s32.totalorder %v836, %v841
        %vm870 = vcmp.lt.s32.totalorder %v837, %v841
        %vm871 = vcmp.lt.s32.totalorder %v838, %v841
        %vm872 = vcmp.lt.s32.totalorder %v839, %v841
        %vm873 = vcmp.lt.s32.totalorder %v840, %v841
        %v874 = vsel %vm842, %v773, 0.0
        %v875 = vsel %vm843, %v774, 0.0
        %v876 = vsel %vm844, %v775, 0.0
        %v877 = vsel %vm845, %v776, 0.0
        %v878 = vsel %vm846, %v777, 0.0
        %v879 = vsel %vm847, %v778, 0.0
        %v880 = vsel %vm848, %v779, 0.0
        %v881 = vsel %vm849, %v780, 0.0
        %v882 = vsel %vm850, %v781, 0.0
        %v883 = vsel %vm851, %v782, 0.0
        %v884 = vsel %vm852, %v783, 0.0
        %v885 = vsel %vm853, %v784, 0.0
        %v886 = vsel %vm854, %v785, 0.0
        %v887 = vsel %vm855, %v786, 0.0
        %v888 = vsel %vm856, %v787, 0.0
        %v889 = vsel %vm857, %v788, 0.0
        %v890 = vsel %vm858, %v789, 0.0
        %v891 = vsel %vm859, %v790, 0.0
        %v892 = vsel %vm860, %v791, 0.0
        %v893 = vsel %vm861, %v792, 0.0
        %v894 = vsel %vm862, %v793, 0.0
        %v895 = vsel %vm863, %v794, 0.0
        %v896 = vsel %vm864, %v795, 0.0
        %v897 = vsel %vm865, %v796, 0.0
        %v898 = vsel %vm866, %v797, 0.0
        %v899 = vsel %vm867, %v798, 0.0
        %v900 = vsel %vm868, %v799, 0.0
        %v901 = vsel %vm869, %v800, 0.0
        %v902 = vsel %vm870, %v801, 0.0
        %v903 = vsel %vm871, %v802, 0.0
        %v904 = vsel %vm872, %v803, 0.0
        %v905 = vsel %vm873, %v804, 0.0
        %v906 = vld [vmem:[%s307] sm:$0xff]
        %v907 = vadd.f32 %v874, %v875
        %v908 = vadd.f32 %v907, %v876
        %v909 = vadd.f32 %v908, %v877
        %v910 = vadd.f32 %v909, %v878
        %v911 = vadd.f32 %v910, %v879
        %v912 = vadd.f32 %v911, %v880
        %v913 = vadd.f32 %v912, %v881
        %v914 = vadd.f32 %v913, %v882
        %v915 = vadd.f32 %v914, %v883
        %v916 = vadd.f32 %v915, %v884
        %v917 = vadd.f32 %v916, %v885
        %v918 = vadd.f32 %v917, %v886
        %v919 = vadd.f32 %v918, %v887
        %v920 = vadd.f32 %v919, %v888
        %v921 = vadd.f32 %v920, %v889
        %v922 = vadd.f32 %v921, %v890
        %v923 = vadd.f32 %v922, %v891
        %v924 = vadd.f32 %v923, %v892
        %v925 = vadd.f32 %v924, %v893
        %v926 = vadd.f32 %v925, %v894
        %v927 = vadd.f32 %v926, %v895
        %v928 = vadd.f32 %v927, %v896
        %v929 = vadd.f32 %v928, %v897
        %v930 = vadd.f32 %v929, %v898
        %v931 = vadd.f32 %v930, %v899
        %v932 = vadd.f32 %v931, %v900
        %v933 = vadd.f32 %v932, %v901
        %v934 = vadd.f32 %v933, %v902
        %v935 = vadd.f32 %v934, %v903
        %v936 = vadd.f32 %v935, %v904
        %v937 = vadd.f32 %v936, %v905
        %v938 = vadd.f32 %v906, %v937
        %939 = vst [vmem:[%s307] sm:$0xff] %v938
        %s940 = sand.u32 %s139, 1
        %s941 = scalar_lea.sflag [#allocation4], %s940
        %s942 = sand.u32 %s139, 1
        %s943 = smul.addr %s942, 8
        %s944 = scalar_lea.vmem [#allocation8], %s943
        // Predicated region
        $region49: #{tpu_custom_call.1} parent=31 // pred_check
          %p945 = pneg %p149
        $region50: #{tpu_custom_call.1} parent=31 // pred_check_branch
          %947 = sbr.rel (%p945) target = $region52
        $region51: #{tpu_custom_call.1} parent=31 // pred_region
          %s949 = ssub.s32 128, 128
          %950 = vsyncadd %s941, %s949
          %s951 = smul.addr %s27, 128
          %s952 = scalar_lea.hbm %s3, %s951
          %s954 = sshll.u32 %s944, 4
          %s955 = int_to_ptr.vmem [resolvable:$true] %s954
          %957 = dma.vmem_to_hbm [thread:$0]  %s955, 128, %s952, %s941
        $region52: #{tpu_custom_call.1} parent=31 // pred_fallthru
          _
      $region32: #{tpu_custom_call.1} parent=5 // pred_fallthru
        _
      %p958 = scmp.le.s32.totalorder 2, %s18
      // Predicated region
      $region53: #{tpu_custom_call.1} parent=5 // pred_check
        %p959 = pneg %p958
      $region54: #{tpu_custom_call.1} parent=5 // pred_check_branch
        %961 = sbr.rel (%p959) target = $region56
      $region55: #{tpu_custom_call.1} parent=5 // pred_region
        %s962 = ssub.s32 %s18, 2
        // Predicated region
        $region57: #{tpu_custom_call.1} parent=55 // pred_check
          %p963 = pneg %p155
        $region58: #{tpu_custom_call.1} parent=55 // pred_check_branch
          %965 = sbr.rel (%p963) target = $region60
        $region59: #{tpu_custom_call.1} parent=55 // pred_region
          %s966 = sand.u32 %s140, 1
          %s967 = scalar_lea.sflag [#allocation4], %s966
          %s968 = sand.u32 %s140, 1
          %s969 = smul.addr %s968, 8
          %s970 = scalar_lea.vmem [#allocation8], %s969
          %971 = dma.done %s967, 128
        $region60: #{tpu_custom_call.1} parent=55 // pred_fallthru
          _
      $region56: #{tpu_custom_call.1} parent=5 // pred_fallthru
        _
    $region6: #{tpu_custom_call.1} parent=1 // loop_footer
      %s22 = sadd.s32 1, %s18
    $region7: #{tpu_custom_call.1} parent=1 // loop_footer_branch
      %17 = sbr.rel target = $region3
    $region8: #{tpu_custom_call.1} parent=1 // loop_exit
      _
    %972 = vsyncpa [#allocation3], 1
    %s973 = scalar_lea.sflag [#allocation3], 1
    %974 = vsyncpa %s973, 1
    %975 = vsyncpa [#allocation6], 1
    %s976 = scalar_lea.sflag [#allocation6], 1
    %977 = vsyncpa %s976, 1
    %978 = vsyncpa [#allocation4], 1
    %s979 = scalar_lea.sflag [#allocation4], 1
    %980 = vsyncpa %s979, 1

</llo_original>
